<compile_context>
chip_gen: v7x
topology: tpu7x:2x2x1
jax: 0.10.0
libtpu: 0.0.40
codegen_flags: <defaults>
</compile_context>

<pallas_src>
import jax
import jax.numpy as jnp
from jax.experimental import pallas as pl
from jax.experimental.pallas import tpu as pltpu


def pos_add_kernel(x_ref, pos_ref, o_ref):
    # x_ref, pos_ref, o_ref: (1, row_tile, W*D)
    o_ref[...] = (x_ref[...] + pos_ref[...]).astype(o_ref.dtype)


def _choose_row_tile(H, WD, itemsize, target_bytes=1 << 20):
    """Largest row tile that (a) is a multiple of 8 dividing H (or H itself) and
    (b) keeps one block at or under ~target_bytes."""
    if H * WD * itemsize <= target_bytes:
        return H
    max_rows = max(8, target_bytes // (WD * itemsize))
    best = None
    for cand in range(8, H, 8):
        if H % cand == 0 and cand <= max_rows:
            best = cand
    return best if best is not None else H


def position_embedding_learned(x, row_embed, col_embed):
    """x: (B, H*W, D); row_embed: (H, D//2); col_embed: (W, D//2)."""
    B, S, D = x.shape
    H, Dh = row_embed.shape
    W = col_embed.shape[0]
    assert S == H * W and D == 2 * Dh

    WD = W * D
    itemsize = jnp.dtype(x.dtype).itemsize

    # --- precompute pos in the wrapper (hoisted out of the kernel) ---------
    # col half first, row half second (matches torch.cat order).
    col_b = jnp.broadcast_to(col_embed[None, :, :], (H, W, Dh))
    row_b = jnp.broadcast_to(row_embed[:, None, :], (H, W, Dh))
    pos = jnp.concatenate([col_b, row_b], axis=-1).reshape(1, H, WD)  # f32, ~H*W*D*4 bytes

    # --- lane-dense layout: (B, H, W*D) ------------------------------------
    x3 = x.reshape(B, H, WD)

    rt = _choose_row_tile(H, WD, itemsize)
    n_row_tiles = H // rt

    cost = pl.CostEstimate(
        flops=B * H * WD,
        transcendentals=0,
        bytes_accessed=(2 * B * H * WD + H * WD) * itemsize,
    )

    out3 = pl.pallas_call(
        pos_add_kernel,
        out_shape=jax.ShapeDtypeStruct((B, H, WD), x.dtype),
        grid_spec=pltpu.PrefetchScalarGridSpec(
            num_scalar_prefetch=0,
            grid=(B, n_row_tiles),
            in_specs=[
                pl.BlockSpec((1, rt, WD), lambda b, h: (b, h, 0)),   # x block
                pl.BlockSpec((1, rt, WD), lambda b, h: (0, h, 0)),   # pos block (batch-invariant)
            ],
            out_specs=pl.BlockSpec((1, rt, WD), lambda b, h: (b, h, 0)),
        ),
        compiler_params=pltpu.CompilerParams(
            dimension_semantics=("parallel", "parallel")),
        cost_estimate=cost,
    )(x3, pos)

    return out3.reshape(B, S, D)


if __name__ == "__main__":
    # Shapes consistent with the module: feature_size=(16, 16), embed_dim=32.
    B = 2
    H, W = 16, 16
    D = 32

    key = jax.random.PRNGKey(0)
    kx, kr, kc = jax.random.split(key, 3)

    # nn.init.uniform_ default is U(0, 1) — deterministic synthetic params.
    row_embed = jax.random.uniform(kr, (H, D // 2), dtype=jnp.float32)
    col_embed = jax.random.uniform(kc, (W, D // 2), dtype=jnp.float32)
    x = jax.random.normal(kx, (B, H * W, D), dtype=jnp.float32)

    out = position_embedding_learned(x, row_embed, col_embed)
    out = jax.block_until_ready(out)

    # Pure-JAX reference (mirrors the PyTorch forward exactly).
    col_b = jnp.broadcast_to(col_embed[None, :, :], (H, W, D // 2))
    row_b = jnp.broadcast_to(row_embed[:, None, :], (H, W, D // 2))
    pos_ref = jnp.concatenate([col_b, row_b], axis=-1).reshape(1, H * W, D)
    ref = x + pos_ref

    assert out.shape == (B, H * W, D)
    assert jnp.allclose(out, ref, atol=1e-6, rtol=1e-6)

    print("KERNEL_OK")
</pallas_src>

<mosaic_0001>
module attributes {stable_mosaic.version = 11 : i64} {
  func.func @pos_add_kernel(%arg0: i32, %arg1: i32, %arg2: memref<1x16x512xf32, #tpu.memory_space<vmem>>, %arg3: memref<1x16x512xf32, #tpu.memory_space<vmem>>, %arg4: memref<1x16x512xf32, #tpu.memory_space<vmem>>) attributes {dimension_semantics = [#tpu.dimension_semantics<parallel>, #tpu.dimension_semantics<parallel>], iteration_bounds = array<i64: 2, 1>, scalar_prefetch = 0 : i64, scratch_operands = 0 : i64, tpu.core_type = #tpu.core_type<tc>, window_params = [{transform_indices = @transform_0, window_bounds = array<i64: 1, 16, 512>}, {transform_indices = @transform_1, window_bounds = array<i64: 1, 16, 512>}, {transform_indices = @transform_2, window_bounds = array<i64: 1, 16, 512>}]} {
    %c0 = arith.constant 0 : index
    %c0_0 = arith.constant 0 : index
    %c0_1 = arith.constant 0 : index
    %0 = vector.load %arg2[%c0, %c0_0, %c0_1] : memref<1x16x512xf32, #tpu.memory_space<vmem>>, vector<1x16x512xf32>
    %c0_2 = arith.constant 0 : index
    %c0_3 = arith.constant 0 : index
    %c0_4 = arith.constant 0 : index
    %1 = vector.load %arg3[%c0_2, %c0_3, %c0_4] : memref<1x16x512xf32, #tpu.memory_space<vmem>>, vector<1x16x512xf32>
    %2 = arith.addf %0, %1 : vector<1x16x512xf32>
    %c0_5 = arith.constant 0 : index
    %c0_6 = arith.constant 0 : index
    %c0_7 = arith.constant 0 : index
    %3 = vector.load %arg4[%c0_5, %c0_6, %c0_7] : memref<1x16x512xf32, #tpu.memory_space<vmem>>, vector<1x16x512xf32>
    tpu.vector_store %arg4[%c0_5, %c0_6, %c0_7], %2 {strides = array<i32>} : memref<1x16x512xf32, #tpu.memory_space<vmem>>, vector<1x16x512xf32>,
    return
  }
  func.func @transform_0(%arg0: i32, %arg1: i32) -> (i32, i32, i32) {
    %c0_i32 = arith.constant 0 : i32
    %c0_i32_0 = arith.constant 0 : i32
    return %arg0, %arg1, %c0_i32 : i32, i32, i32
  }
  func.func @transform_1(%arg0: i32, %arg1: i32) -> (i32, i32, i32) {
    %c0_i32 = arith.constant 0 : i32
    %c0_i32_0 = arith.constant 0 : i32
    %c0_i32_1 = arith.constant 0 : i32
    return %c0_i32, %arg1, %c0_i32_0 : i32, i32, i32
  }
  func.func @transform_2(%arg0: i32, %arg1: i32) -> (i32, i32, i32) {
    %c0_i32 = arith.constant 0 : i32
    %c0_i32_0 = arith.constant 0 : i32
    return %arg0, %arg1, %c0_i32 : i32, i32, i32
  }
}

</mosaic_0001>

<llo_original>
// kernel: tpu_custom_call.1
$region0: #{tpu_custom_call.1}
  #allocation0 [shape = 'u32[]', space=smem, size = 0x4, offset = 0x4, fixed_abs, tag = 'smem constant byte address 0x4 - core index']
  #allocation1 [shape = 'u32[144,128]{1,0:T(1,128)}', space=vmem, size = 0x12000, scoped, tag = 'internal scratch']
  %s0 = inlined_call_operand.hbm [shape: f32[2,16,512], index: 0, kind: input, shape index: {}]
  %s1 = inlined_call_operand.hbm [shape: f32[1,16,512], index: 1, kind: input, shape index: {}]
  %s2 = inlined_call_operand.hbm [shape: f32[2,16,512], index: 2, kind: output, shape index: {}]
  %s3 = sld [smem:[#allocation0]]
  $region49: #{tpu_custom_call.1} parent=0
    _
  %s5 = ssub.s32 1, %s3
  %s6 = scalar_select 0, %s5, %s3
  $region1: #{tpu_custom_call.1} parent=0
    #allocation2 [shape = 'u8[65536]{0}', space=vmem, size = 0x10000, scoped, tag = 'input window, operand 0']
    #allocation3 [shape = 's32[2]{0}', space=sflag, size = 0x8, scoped, tag = 'scoped memory for tpu_custom_call.1']
    #allocation4 [shape = 's32[2]{0}', space=sflag, size = 0x8, scoped, tag = 'scoped memory for tpu_custom_call.1']
    #allocation5 [shape = 'u8[32768]{0}', space=vmem, size = 0x8000, scoped, tag = 'input window, operand 1, single buffered']
    #allocation6 [shape = 's32[1]{0}', space=sflag, size = 0x4, scoped, tag = 'scoped memory for tpu_custom_call.1']
    #allocation7 [shape = 'u8[65536]{0}', space=vmem, size = 0x10000, scoped, tag = 'output window, operand 0']
    %7 = vsyncpa [#allocation3], 0
    %s8 = scalar_lea.sflag [#allocation3], 1
    %9 = vsyncpa %s8, 0
    %10 = vsyncpa [#allocation6], 0
    %11 = vsyncpa [#allocation4], 0
    %s12 = scalar_lea.sflag [#allocation4], 1
    %13 = vsyncpa %s12, 0
    loop: start=0, step=1, limit=4
    $region2: #{tpu_custom_call.1} parent=1 // loop_pre_header
      _
    $region3: #{tpu_custom_call.1} parent=1 // loop_header
      %s15 = sphi 0, %s19
      %p16 = scmp.ge.s32.totalorder %s15, 4
      %s22 = sphi 0, %s34
      %s23 = sphi 0, %s30
      %s24 = sphi 0, %s22
      %s25 = sphi 0, %s23
      %s26 = sphi 0, %s24
      %s27 = sphi 0, %s25
      %s39 = sphi 0, %s41
      %s42 = sphi 0, %s39
      %s43 = sphi 0, %s42
      %s59 = sphi 0, %s43
      %s65 = sphi 0, %s67
      %s68 = sphi 0, %s65
      %s69 = sphi 0, %s68
      %s85 = sphi 0, %s69
      %s93 = sphi 0, %s95
      %s96 = sphi 0, %s93
      %s97 = sphi 0, %s96
      %s113 = sphi 0, %s97
    $region4: #{tpu_custom_call.1} parent=1 // loop_header_branch
      %18 = sbr.rel (%p16) target = $region8
    $region5: #{tpu_custom_call.1} parent=1 // loop_body
      %s20 = ssub.s32 %s15, 1
      %s21 = ssub.s32 %s15, 2
      %s28 = sadd.s32 1, %s23
      %p29 = scmp.ge.s32.totalorder %s28, 1
      %s30 = scalar_select %p29, 0, %s28
      %s31 = sadd.s32 1, %s22
      %s32 = scalar_select %p29, %s31, %s22
      %p33 = scmp.ge.s32.totalorder %s32, 2
      %s34 = scalar_select %p33, 0, %s32
      %s35 = ssub.s32 %s22, %s34
      %s36 = ssub.s32 %s23, %s30
      %s37 = sor.u32 %s35, %s36
      %p38 = scmp.eq.s32.totalorder %s37, 0
      %s40 = sadd.s32 %s39, 1
      %s41 = scalar_select %p38, %s39, %s40
      %p44 = pneg %p38
      %p45 = scmp.eq.s32.totalorder %s15, 1
      %p46 = por %p44, %p45
      %p47 = scmp.ne.s32.totalorder %s39, %s42
      %p48 = scmp.eq.s32.totalorder %s15, 0
      %p49 = por %p47, %p48
      %p50 = scmp.ne.s32.totalorder %s39, %s42
      %p51 = scmp.eq.s32.totalorder %s20, 1
      %p52 = por %p50, %p51
      %p53 = scmp.ne.s32.totalorder %s42, %s43
      %p54 = scmp.eq.s32.totalorder %s20, 0
      %p55 = por %p53, %p54
      %p56 = scmp.ne.s32.totalorder %s42, %s43
      %p57 = scmp.eq.s32.totalorder %s21, 1
      %p58 = por %p56, %p57
      %p60 = scmp.ne.s32.totalorder %s43, %s59
      %p61 = scmp.eq.s32.totalorder %s21, 0
      %p62 = por %p60, %p61
      %s63 = ssub.s32 %s23, %s30
      %p64 = scmp.eq.s32.totalorder %s63, 0
      %s66 = sadd.s32 %s65, 1
      %s67 = scalar_select %p64, %s65, %s66
      %p70 = pneg %p64
      %p71 = scmp.eq.s32.totalorder %s15, 1
      %p72 = por %p70, %p71
      %p73 = scmp.ne.s32.totalorder %s65, %s68
      %p74 = scmp.eq.s32.totalorder %s15, 0
      %p75 = por %p73, %p74
      %p76 = scmp.ne.s32.totalorder %s65, %s68
      %p77 = scmp.eq.s32.totalorder %s20, 1
      %p78 = por %p76, %p77
      %p79 = scmp.ne.s32.totalorder %s68, %s69
      %p80 = scmp.eq.s32.totalorder %s20, 0
      %p81 = por %p79, %p80
      %p82 = scmp.ne.s32.totalorder %s68, %s69
      %p83 = scmp.eq.s32.totalorder %s21, 1
      %p84 = por %p82, %p83
      %p86 = scmp.ne.s32.totalorder %s69, %s85
      %p87 = scmp.eq.s32.totalorder %s21, 0
      %p88 = por %p86, %p87
      %s89 = ssub.s32 %s22, %s34
      %s90 = ssub.s32 %s23, %s30
      %s91 = sor.u32 %s89, %s90
      %p92 = scmp.eq.s32.totalorder %s91, 0
      %s94 = sadd.s32 %s93, 1
      %s95 = scalar_select %p92, %s93, %s94
      %p98 = pneg %p92
      %p99 = scmp.eq.s32.totalorder %s15, 1
      %p100 = por %p98, %p99
      %p101 = scmp.ne.s32.totalorder %s93, %s96
      %p102 = scmp.eq.s32.totalorder %s15, 0
      %p103 = por %p101, %p102
      %p104 = scmp.ne.s32.totalorder %s93, %s96
      %p105 = scmp.eq.s32.totalorder %s20, 1
      %p106 = por %p104, %p105
      %p107 = scmp.ne.s32.totalorder %s96, %s97
      %p108 = scmp.eq.s32.totalorder %s20, 0
      %p109 = por %p107, %p108
      %p110 = scmp.ne.s32.totalorder %s96, %s97
      %p111 = scmp.eq.s32.totalorder %s21, 1
      %p112 = por %p110, %p111
      %p114 = scmp.ne.s32.totalorder %s97, %s113
      %p115 = scmp.eq.s32.totalorder %s21, 0
      %p116 = por %p114, %p115
      %p117 = scmp.le.s32.totalorder 1, %s15
      %p118 = scmp.lt.s32.totalorder %s15, 3
      %p119 = pnand %p117, %p118
      %p120 = pneg %p119
      // Predicated region
      $region9: #{tpu_custom_call.1} parent=5 // pred_check
        _
      $region10: #{tpu_custom_call.1} parent=5 // pred_check_branch
        %122 = sbr.rel (%p119) target = $region12
      $region11: #{tpu_custom_call.1} parent=5 // pred_region
        %s123 = ssub.s32 %s15, 1
        // Predicated region
        $region13: #{tpu_custom_call.1} parent=11 // pred_check
          %p124 = pneg %p81
        $region14: #{tpu_custom_call.1} parent=11 // pred_check_branch
          %126 = sbr.rel (%p124) target = $region16
        $region15: #{tpu_custom_call.1} parent=11 // pred_region
          %s127 = smul.u32 2, %s25
          %s129 = ssub.s32 1024, 1024
          %130 = vsyncadd [#allocation6], %s129
          %s131 = smul.addr %s127, 4
          %s132 = smul.addr %s131, 128
          %s133 = scalar_lea.hbm %s1, %s132
          %s134 = sshll.u32 [#allocation5], 4
          %s135 = int_to_ptr.vmem [resolvable:$true] %s134
          %140 = dma.hbm_to_vmem [thread:$0]  %s133, 1024, %s135, [#allocation6], 512, 512, 32
        $region16: #{tpu_custom_call.1} parent=11 // pred_fallthru
          _
      $region12: #{tpu_custom_call.1} parent=5 // pred_fallthru
        _
      %p141 = scmp.lt.s32.totalorder %s15, 2
      // Predicated region
      $region17: #{tpu_custom_call.1} parent=5 // pred_check
        %p142 = pneg %p141
      $region18: #{tpu_custom_call.1} parent=5 // pred_check_branch
        %144 = sbr.rel (%p142) target = $region20
      $region19: #{tpu_custom_call.1} parent=5 // pred_region
        // Predicated region
        $region21: #{tpu_custom_call.1} parent=19 // pred_check
          %p145 = pneg %p49
        $region22: #{tpu_custom_call.1} parent=19 // pred_check_branch
          %147 = sbr.rel (%p145) target = $region24
        $region23: #{tpu_custom_call.1} parent=19 // pred_region
          %s148 = sand.u32 %s39, 1
          %s149 = scalar_lea.sflag [#allocation3], %s148
          %s150 = sand.u32 %s39, 1
          %s151 = smul.addr %s150, 64
          %s152 = scalar_lea.vmem [#allocation2], %s151
          %s153 = smul.u32 2, %s23
          %s155 = ssub.s32 1024, 1024
          %156 = vsyncadd %s149, %s155
          %s157 = smul.addr %s153, 4
          %s158 = smul.addr %s22, 8
          %s159 = sadd.s32 %s157, %s158
          %s160 = smul.addr %s159, 128
          %s161 = scalar_lea.hbm %s0, %s160
          %s162 = sshll.u32 %s152, 4
          %s163 = int_to_ptr.vmem [resolvable:$true] %s162
          %168 = dma.hbm_to_vmem [thread:$0]  %s161, 1024, %s163, %s149, 512, 512, 32
        $region24: #{tpu_custom_call.1} parent=19 // pred_fallthru
          _
      $region20: #{tpu_custom_call.1} parent=5 // pred_fallthru
        _
      %p169 = scmp.le.s32.totalorder 1, %s15
      %p170 = scmp.lt.s32.totalorder %s15, 3
      %p171 = pnand %p169, %p170
      %p172 = pneg %p171
      // Predicated region
      $region25: #{tpu_custom_call.1} parent=5 // pred_check
        _
      $region26: #{tpu_custom_call.1} parent=5 // pred_check_branch
        %174 = sbr.rel (%p171) target = $region28
      $region27: #{tpu_custom_call.1} parent=5 // pred_region
        %s175 = ssub.s32 %s15, 1
        %s176 = sand.u32 %s42, 1
        %s177 = scalar_lea.sflag [#allocation3], %s176
        %s178 = sand.u32 %s42, 1
        %s179 = smul.addr %s178, 64
        %s180 = scalar_lea.vmem [#allocation2], %s179
        // Predicated region
        $region29: #{tpu_custom_call.1} parent=27 // pred_check
          %p181 = pneg %p55
        $region30: #{tpu_custom_call.1} parent=27 // pred_check_branch
          %183 = sbr.rel (%p181) target = $region32
        $region31: #{tpu_custom_call.1} parent=27 // pred_region
          %184 = dma.done %s177, 1024
        $region32: #{tpu_custom_call.1} parent=27 // pred_fallthru
          _
        // Predicated region
        $region33: #{tpu_custom_call.1} parent=27 // pred_check
          %p185 = pneg %p81
        $region34: #{tpu_custom_call.1} parent=27 // pred_check_branch
          %187 = sbr.rel (%p185) target = $region36
        $region35: #{tpu_custom_call.1} parent=27 // pred_region
          %188 = dma.done [#allocation6], 1024
        $region36: #{tpu_custom_call.1} parent=27 // pred_fallthru
          _
        %s189 = sand.u32 %s42, 1
        %s190 = scalar_lea.sflag [#allocation3], %s189
        %s191 = sand.u32 %s42, 1
        %s192 = smul.addr %s191, 64
        %s193 = scalar_lea.vmem [#allocation2], %s192
        %p194 = pneg %p55
        %p195 = pneg %p52
        %p196 = pneg %p81
        %p197 = pneg %p78
        %p198 = pneg %p109
        %p199 = pneg %p106
        %s200 = sand.u32 %s96, 1
        %s201 = scalar_lea.sflag [#allocation4], %s200
        %s202 = sand.u32 %s96, 1
        %s203 = smul.addr %s202, 64
        %s204 = scalar_lea.vmem [#allocation7], %s203
        %s205 = smul.u32 2, %s25
        %s206 = smul.u32 2, %s25
        %s207 = smul.u32 2, %s25
        %v208 = vld [vmem:[%s180] sm:$0xff]
        %v209 = vld [vmem:[%s180 + $0x8] sm:$0xff]
        %v210 = vld [vmem:[%s180 + $0x10] sm:$0xff]
        %v211 = vld [vmem:[%s180 + $0x18] sm:$0xff]
        %v212 = vld [vmem:[%s180 + $0x20] sm:$0xff]
        %v213 = vld [vmem:[%s180 + $0x28] sm:$0xff]
        %v214 = vld [vmem:[%s180 + $0x30] sm:$0xff]
        %v215 = vld [vmem:[%s180 + $0x38] sm:$0xff]
        %v216 = vld [vmem:[#allocation5] sm:$0xff]
        %v217 = vld [vmem:[#allocation5 + $0x8] sm:$0xff]
        %v218 = vld [vmem:[#allocation5 + $0x10] sm:$0xff]
        %v219 = vld [vmem:[#allocation5 + $0x18] sm:$0xff]
        %v220 = vld [vmem:[#allocation5 + $0x20] sm:$0xff]
        %v221 = vld [vmem:[#allocation5 + $0x28] sm:$0xff]
        %v222 = vld [vmem:[#allocation5 + $0x30] sm:$0xff]
        %v223 = vld [vmem:[#allocation5 + $0x38] sm:$0xff]
        %v224 = vadd.f32 %v208, %v216
        %v225 = vadd.f32 %v209, %v217
        %v226 = vadd.f32 %v210, %v218
        %v227 = vadd.f32 %v211, %v219
        %v228 = vadd.f32 %v212, %v220
        %v229 = vadd.f32 %v213, %v221
        %v230 = vadd.f32 %v214, %v222
        %v231 = vadd.f32 %v215, %v223
        %232 = vst [vmem:[%s204] sm:$0xff] %v224
        %233 = vst [vmem:[%s204 + $0x8] sm:$0xff] %v225
        %234 = vst [vmem:[%s204 + $0x10] sm:$0xff] %v226
        %235 = vst [vmem:[%s204 + $0x18] sm:$0xff] %v227
        %236 = vst [vmem:[%s204 + $0x20] sm:$0xff] %v228
        %237 = vst [vmem:[%s204 + $0x28] sm:$0xff] %v229
        %238 = vst [vmem:[%s204 + $0x30] sm:$0xff] %v230
        %239 = vst [vmem:[%s204 + $0x38] sm:$0xff] %v231
        %s240 = sand.u32 %s96, 1
        %s241 = scalar_lea.sflag [#allocation4], %s240
        %s242 = sand.u32 %s96, 1
        %s243 = smul.addr %s242, 64
        %s244 = scalar_lea.vmem [#allocation7], %s243
        // Predicated region
        $region37: #{tpu_custom_call.1} parent=27 // pred_check
          %p245 = pneg %p106
        $region38: #{tpu_custom_call.1} parent=27 // pred_check_branch
          %247 = sbr.rel (%p245) target = $region40
        $region39: #{tpu_custom_call.1} parent=27 // pred_region
          %s248 = smul.u32 2, %s25
          %s250 = ssub.s32 1024, 1024
          %251 = vsyncadd %s241, %s250
          %s252 = smul.addr %s248, 4
          %s253 = smul.addr %s24, 8
          %s254 = sadd.s32 %s252, %s253
          %s255 = smul.addr %s254, 128
          %s256 = scalar_lea.hbm %s2, %s255
          %s257 = sshll.u32 %s244, 4
          %s258 = int_to_ptr.vmem [resolvable:$true] %s257
          %263 = dma.vmem_to_hbm [thread:$0]  %s258, 1024, %s256, %s241, 512, 512, 32
        $region40: #{tpu_custom_call.1} parent=27 // pred_fallthru
          _
      $region28: #{tpu_custom_call.1} parent=5 // pred_fallthru
        _
      %p264 = scmp.le.s32.totalorder 2, %s15
      // Predicated region
      $region41: #{tpu_custom_call.1} parent=5 // pred_check
        %p265 = pneg %p264
      $region42: #{tpu_custom_call.1} parent=5 // pred_check_branch
        %267 = sbr.rel (%p265) target = $region44
      $region43: #{tpu_custom_call.1} parent=5 // pred_region
        %s268 = ssub.s32 %s15, 2
        // Predicated region
        $region45: #{tpu_custom_call.1} parent=43 // pred_check
          %p269 = pneg %p112
        $region46: #{tpu_custom_call.1} parent=43 // pred_check_branch
          %271 = sbr.rel (%p269) target = $region48
        $region47: #{tpu_custom_call.1} parent=43 // pred_region
          %s272 = sand.u32 %s97, 1
          %s273 = scalar_lea.sflag [#allocation4], %s272
          %s274 = sand.u32 %s97, 1
          %s275 = smul.addr %s274, 64
          %s276 = scalar_lea.vmem [#allocation7], %s275
          %277 = dma.done %s273, 1024
        $region48: #{tpu_custom_call.1} parent=43 // pred_fallthru
          _
      $region44: #{tpu_custom_call.1} parent=5 // pred_fallthru
        _
    $region6: #{tpu_custom_call.1} parent=1 // loop_footer
      %s19 = sadd.s32 1, %s15
    $region7: #{tpu_custom_call.1} parent=1 // loop_footer_branch
      %14 = sbr.rel target = $region3
    $region8: #{tpu_custom_call.1} parent=1 // loop_exit
      _
    %278 = vsyncpa [#allocation3], 1
    %s279 = scalar_lea.sflag [#allocation3], 1
    %280 = vsyncpa %s279, 1
    %281 = vsyncpa [#allocation6], 1
    %282 = vsyncpa [#allocation4], 1
    %s283 = scalar_lea.sflag [#allocation4], 1
    %284 = vsyncpa %s283, 1

</llo_original>
